<compile_context>
chip_gen: v6e
topology: v6e:2x2x1
jax: 0.10.0
libtpu: 0.0.40
codegen_flags: <defaults>
</compile_context>

<pallas_src>
import functools

import jax
import jax.numpy as jnp
from jax import lax
from jax.experimental import pallas as pl
from jax.experimental.pallas import tpu as pltpu

BIG = 1.0e12


def _mcce_kernel(pred_ref, true_ref, out_ref, acc_ref, *,
                 row_tile, steps_per_chunk, n_valid_rows):
    c = pl.program_id(0)   # chunk axis (parallel)
    s = pl.program_id(1)   # step-within-chunk axis (arbitrary / reduction)

    @pl.when(s == 0)
    def _():
        acc_ref[...] = jnp.zeros_like(acc_ref)

    y_pred = pred_ref[...].astype(jnp.float32)
    is_pos = true_ref[...].astype(jnp.float32) > 0.5
    neg_big = jnp.float32(-BIG)

    def lse_with_zero(x):
        # logsumexp([x, 0], axis=-1): exactly the cat-with-zeros + logsumexp
        # of the reference module.
        m = jnp.maximum(jnp.max(x, axis=-1, keepdims=True), 0.0)
        ssum = jnp.sum(jnp.exp(x - m), axis=-1, keepdims=True) + jnp.exp(-m)
        return jnp.log(ssum) + m

    # Select-based masking: fewer VALU ops and fewer live block-sized
    # temporaries than (1-2y)*p followed by the -y*BIG subtractions.
    pos_loss = lse_with_zero(jnp.where(is_pos, -y_pred, neg_big))
    neg_loss = lse_with_zero(jnp.where(is_pos, neg_big, y_pred))
    per_row = pos_loss + neg_loss                        # (row_tile, 1)

    # Mask rows past the true end of the input (ragged last block and any
    # clamped duplicate blocks). Select, not arithmetic, so NaN/Inf in
    # out-of-bounds rows cannot leak into the sum.
    t = c * steps_per_chunk + s                          # linear block index
    row0 = t * row_tile
    local = lax.broadcasted_iota(jnp.int32, (row_tile, 1), 0)
    valid = (row0 + local) < n_valid_rows
    acc_ref[...] += jnp.sum(jnp.where(valid, per_row, 0.0),
                            axis=0, keepdims=True)

    @pl.when(s == pl.num_programs(1) - 1)
    def _():
        # Emit this chunk's partial sum at [0, 0, 0] of a lane-dense block.
        ri = lax.broadcasted_iota(jnp.int32, (1, 8, 128), 1)
        li = lax.broadcasted_iota(jnp.int32, (1, 8, 128), 2)
        out_ref[...] = jnp.where((ri == 0) & (li == 0), acc_ref[...], 0.0)


def _pick_row_tile(rows, num_classes, itemsize):
    # ~2 MiB per input block: large enough to run near the HBM roofline
    # (measured: 512-wide f32 tiles hit ~85%), small enough that 2 inputs x 2
    # pipeline buffers + f32 intermediates stay well inside v7x's 64 MiB VMEM.
    budget = 2 * 1024 * 1024
    per_row = max(1, num_classes) * max(itemsize, 4)   # f32 temps dominate
    t = max(8, (budget // per_row) // 8 * 8)           # multiple of 8 sublanes
    padded_rows = ((rows + 7) // 8) * 8
    return min(t, padded_rows)


def multilabel_categorical_crossentropy(y_pred, y_true):
    """Pallas implementation of MultilabelCategoricalCrossentropy.forward.

    y_pred, y_true: arrays of identical shape [..., num_classes].
    Returns a scalar float32 loss (mean over all leading dims).
    """
    assert y_pred.shape == y_true.shape
    num_classes = y_pred.shape[-1]
    rows = 1
    for d in y_pred.shape[:-1]:
        rows *= d

    # Keep native dtypes (bf16 preds / int8 labels stream far fewer HBM bytes);
    # the kernel upcasts to f32 for the math. Bool labels are widened to int8
    # only because 1-bit refs don't DMA cleanly.
    if y_true.dtype == jnp.bool_:
        y_true = y_true.astype(jnp.int8)

    pred2d = jnp.reshape(y_pred, (rows, num_classes))
    true2d = jnp.reshape(y_true, (rows, num_classes))

    itemsize = max(pred2d.dtype.itemsize, true2d.dtype.itemsize)
    row_tile = _pick_row_tile(rows, num_classes, itemsize)
    nblocks = (rows + row_tile - 1) // row_tile
    num_chunks = 2 if nblocks >= 2 else 1        # 2-way split for v7x megacore
    steps_per_chunk = (nblocks + num_chunks - 1) // num_chunks

    def in_index_map(c, s):
        t = c * steps_per_chunk + s
        # Over-coverage steps are clamped onto the last valid block; the
        # in-kernel row mask zeroes their contribution.
        return (jnp.minimum(t, nblocks - 1), 0)

    pred_block = row_tile * num_classes * pred2d.dtype.itemsize
    true_block = row_tile * num_classes * true2d.dtype.itemsize
    f32_block = row_tile * num_classes * 4
    need = 2 * (pred_block + true_block) + 6 * f32_block + (2 << 20)
    vmem_limit = int(min(48 << 20, max(need, 16 << 20)))

    partials = pl.pallas_call(
        functools.partial(_mcce_kernel, row_tile=row_tile,
                          steps_per_chunk=steps_per_chunk,
                          n_valid_rows=rows),
        out_shape=jax.ShapeDtypeStruct((num_chunks, 8, 128), jnp.float32),
        grid_spec=pltpu.PrefetchScalarGridSpec(
            num_scalar_prefetch=0,
            grid=(num_chunks, steps_per_chunk),
            in_specs=[
                pl.BlockSpec((row_tile, num_classes), in_index_map),
                pl.BlockSpec((row_tile, num_classes), in_index_map),
            ],
            out_specs=pl.BlockSpec((1, 8, 128), lambda c, s: (c, 0, 0)),
            scratch_shapes=[pltpu.VMEM((1, 1), jnp.float32)],
        ),
        compiler_params=pltpu.CompilerParams(
            dimension_semantics=("parallel", "arbitrary"),
            vmem_limit_bytes=vmem_limit),
    )(pred2d, true2d)

    # TODO(synk): tile the class axis with an online logsumexp if num_classes
    # ever grows so large that one (row_tile, num_classes) block won't fit
    # VMEM; likewise pack k rows per 128-lane vreg row when num_classes < 128.
    return jnp.sum(partials) / jnp.float32(rows)


def _reference(y_pred, y_true):
    """Pure-JAX reference matching the PyTorch module exactly."""
    y_pred = (1 - 2 * y_true) * y_pred
    y_pred_pos = y_pred - (1 - y_true) * BIG
    y_pred_neg = y_pred - y_true * BIG
    zeros = jnp.zeros_like(y_pred_pos[..., :1])
    y_pred_pos = jnp.concatenate([y_pred_pos, zeros], axis=-1)
    y_pred_neg = jnp.concatenate([y_pred_neg, zeros], axis=-1)
    pos_loss = jax.scipy.special.logsumexp(y_pred_pos, axis=-1)
    neg_loss = jax.scipy.special.logsumexp(y_pred_neg, axis=-1)
    return jnp.mean(pos_loss + neg_loss)


if __name__ == "__main__":
    key = jax.random.PRNGKey(0)
    k_pred, k_true = jax.random.split(key)

    batch, seq, num_classes = 2, 8, 32
    y_pred = jax.random.normal(k_pred, (batch, seq, num_classes),
                               dtype=jnp.float32) * 3.0
    y_true = jax.random.bernoulli(
        k_true, p=0.2, shape=(batch, seq, num_classes)).astype(jnp.float32)

    loss = multilabel_categorical_crossentropy(y_pred, y_true)
    loss = jax.block_until_ready(loss)

    ref = _reference(y_pred, y_true)
    assert jnp.allclose(loss, ref, rtol=1e-5, atol=1e-5), (loss, ref)

    print("KERNEL_OK")
</pallas_src>

<mosaic_0001>
module attributes {stable_mosaic.version = 11 : i64} {
  func.func @_mcce_kernel(%arg0: i32, %arg1: i32, %arg2: memref<16x32xf32, #tpu.memory_space<vmem>>, %arg3: memref<16x32xf32, #tpu.memory_space<vmem>>, %arg4: memref<1x8x128xf32, #tpu.memory_space<vmem>>, %arg5: memref<1x1xf32, #tpu.memory_space<vmem>>) attributes {dimension_semantics = [#tpu.dimension_semantics<parallel>, #tpu.dimension_semantics<arbitrary>], iteration_bounds = array<i64: 1, 1>, scalar_prefetch = 0 : i64, scratch_operands = 1 : i64, tpu.core_type = #tpu.core_type<tc>, window_params = [{transform_indices = @transform_0, window_bounds = array<i64: 16, 32>}, {transform_indices = @transform_1, window_bounds = array<i64: 16, 32>}, {transform_indices = @transform_2, window_bounds = array<i64: 1, 8, 128>}]} {
    %c0_i32 = arith.constant 0 : i32
    %0 = arith.cmpi eq, %arg1, %c0_i32 : i32
    %1 = arith.extui %0 : i1 to i32
    %c0_i32_0 = arith.constant 0 : i32
    %2 = arith.cmpi ne, %1, %c0_i32_0 : i32
    scf.if %2 {
      %cst_24 = arith.constant 0.000000e+00 : f32
      %62 = vector.broadcast %cst_24 : f32 to vector<1x1xf32>
      %c0_25 = arith.constant 0 : index
      %c0_26 = arith.constant 0 : index
      %63 = vector.load %arg5[%c0_25, %c0_26] : memref<1x1xf32, #tpu.memory_space<vmem>>, vector<1x1xf32>
      tpu.vector_store %arg5[%c0_25, %c0_26], %62 {strides = array<i32>} : memref<1x1xf32, #tpu.memory_space<vmem>>, vector<1x1xf32>,
    } else {
    }
    %c0 = arith.constant 0 : index
    %c0_1 = arith.constant 0 : index
    %3 = vector.load %arg2[%c0, %c0_1] : memref<16x32xf32, #tpu.memory_space<vmem>>, vector<16x32xf32>
    %c0_2 = arith.constant 0 : index
    %c0_3 = arith.constant 0 : index
    %4 = vector.load %arg3[%c0_2, %c0_3] : memref<16x32xf32, #tpu.memory_space<vmem>>, vector<16x32xf32>
    %cst = arith.constant 5.000000e-01 : f32
    %5 = vector.broadcast %cst : f32 to vector<16x32xf32>
    %6 = arith.cmpf ogt, %4, %5 : vector<16x32xf32>
    %cst_4 = arith.constant 0.000000e+00 : f32
    %7 = vector.broadcast %cst_4 : f32 to vector<16x32xf32>
    %8 = arith.subf %7, %3 : vector<16x32xf32>
    %cst_5 = arith.constant -9.99999995E+11 : f32
    %9 = vector.broadcast %cst_5 : f32 to vector<16x32xf32>
    %10 = arith.select %6, %8, %9 : vector<16x32xi1>, vector<16x32xf32>
    %cst_6 = arith.constant dense<0xFF800000> : vector<16xf32>
    %11 = vector.multi_reduction <maximumf>, %10, %cst_6 [1] : vector<16x32xf32> to vector<16xf32>
    %12 = vector.shape_cast %11 : vector<16xf32> to vector<16x1xf32>
    %cst_7 = arith.constant 0.000000e+00 : f32
    %13 = vector.broadcast %cst_7 : f32 to vector<16x1xf32>
    %14 = arith.maximumf %12, %13 : vector<16x1xf32>
    %15 = vector.broadcast %14 : vector<16x1xf32> to vector<16x32xf32>
    %16 = arith.subf %10, %15 : vector<16x32xf32>
    %17 = math.exp %16 : vector<16x32xf32>
    %cst_8 = arith.constant dense<0.000000e+00> : vector<16xf32>
    %18 = vector.multi_reduction <add>, %17, %cst_8 [1] : vector<16x32xf32> to vector<16xf32>
    %19 = vector.shape_cast %18 : vector<16xf32> to vector<16x1xf32>
    %cst_9 = arith.constant 0.000000e+00 : f32
    %20 = vector.broadcast %cst_9 : f32 to vector<16x1xf32>
    %21 = arith.subf %20, %14 : vector<16x1xf32>
    %22 = math.exp %21 : vector<16x1xf32>
    %23 = arith.addf %19, %22 : vector<16x1xf32>
    %24 = math.log %23 : vector<16x1xf32>
    %25 = arith.addf %24, %14 : vector<16x1xf32>
    %cst_10 = arith.constant -9.99999995E+11 : f32
    %26 = vector.broadcast %cst_10 : f32 to vector<16x32xf32>
    %27 = arith.select %6, %26, %3 : vector<16x32xi1>, vector<16x32xf32>
    %cst_11 = arith.constant dense<0xFF800000> : vector<16xf32>
    %28 = vector.multi_reduction <maximumf>, %27, %cst_11 [1] : vector<16x32xf32> to vector<16xf32>
    %29 = vector.shape_cast %28 : vector<16xf32> to vector<16x1xf32>
    %cst_12 = arith.constant 0.000000e+00 : f32
    %30 = vector.broadcast %cst_12 : f32 to vector<16x1xf32>
    %31 = arith.maximumf %29, %30 : vector<16x1xf32>
    %32 = vector.broadcast %31 : vector<16x1xf32> to vector<16x32xf32>
    %33 = arith.subf %27, %32 : vector<16x32xf32>
    %34 = math.exp %33 : vector<16x32xf32>
    %cst_13 = arith.constant dense<0.000000e+00> : vector<16xf32>
    %35 = vector.multi_reduction <add>, %34, %cst_13 [1] : vector<16x32xf32> to vector<16xf32>
    %36 = vector.shape_cast %35 : vector<16xf32> to vector<16x1xf32>
    %cst_14 = arith.constant 0.000000e+00 : f32
    %37 = vector.broadcast %cst_14 : f32 to vector<16x1xf32>
    %38 = arith.subf %37, %31 : vector<16x1xf32>
    %39 = math.exp %38 : vector<16x1xf32>
    %40 = arith.addf %36, %39 : vector<16x1xf32>
    %41 = math.log %40 : vector<16x1xf32>
    %42 = arith.addf %41, %31 : vector<16x1xf32>
    %43 = arith.addf %25, %42 : vector<16x1xf32>
    %c1_i32 = arith.constant 1 : i32
    %44 = arith.muli %arg0, %c1_i32 : i32
    %45 = arith.addi %44, %arg1 : i32
    %c16_i32 = arith.constant 16 : i32
    %46 = arith.muli %45, %c16_i32 : i32
    %47 = tpu.iota {dimensions = array<i32: 0>} : vector<16x1xi32>
    %48 = vector.broadcast %46 : i32 to vector<16x1xi32>
    %49 = arith.addi %48, %47 : vector<16x1xi32>
    %c16_i32_15 = arith.constant 16 : i32
    %50 = vector.broadcast %c16_i32_15 : i32 to vector<16x1xi32>
    %51 = arith.cmpi slt, %49, %50 : vector<16x1xi32>
    %c0_16 = arith.constant 0 : index
    %c0_17 = arith.constant 0 : index
    %52 = vector.load %arg5[%c0_16, %c0_17] : memref<1x1xf32, #tpu.memory_space<vmem>>, vector<1x1xf32>
    %cst_18 = arith.constant 0.000000e+00 : f32
    %53 = vector.broadcast %cst_18 : f32 to vector<16x1xf32>
    %54 = arith.select %51, %43, %53 : vector<16x1xi1>, vector<16x1xf32>
    %cst_19 = arith.constant dense<0.000000e+00> : vector<1xf32>
    %55 = vector.multi_reduction <add>, %54, %cst_19 [0] : vector<16x1xf32> to vector<1xf32>
    %56 = vector.shape_cast %55 : vector<1xf32> to vector<1x1xf32>
    %57 = arith.addf %52, %56 : vector<1x1xf32>
    %c0_20 = arith.constant 0 : index
    %c0_21 = arith.constant 0 : index
    %58 = vector.load %arg5[%c0_20, %c0_21] : memref<1x1xf32, #tpu.memory_space<vmem>>, vector<1x1xf32>
    tpu.vector_store %arg5[%c0_20, %c0_21], %57 {strides = array<i32>} : memref<1x1xf32, #tpu.memory_space<vmem>>, vector<1x1xf32>,
    %c0_i32_22 = arith.constant 0 : i32
    %59 = arith.cmpi eq, %arg1, %c0_i32_22 : i32
    %60 = arith.extui %59 : i1 to i32
    %c0_i32_23 = arith.constant 0 : i32
    %61 = arith.cmpi ne, %60, %c0_i32_23 : i32
    scf.if %61 {
      %62 = tpu.iota {dimensions = array<i32: 1>} : vector<1x8x128xi32>
      %63 = tpu.iota {dimensions = array<i32: 2>} : vector<1x8x128xi32>
      %c0_i32_24 = arith.constant 0 : i32
      %64 = vector.broadcast %c0_i32_24 : i32 to vector<1x8x128xi32>
      %65 = arith.cmpi eq, %62, %64 : vector<1x8x128xi32>
      %c0_i32_25 = arith.constant 0 : i32
      %66 = vector.broadcast %c0_i32_25 : i32 to vector<1x8x128xi32>
      %67 = arith.cmpi eq, %63, %66 : vector<1x8x128xi32>
      %68 = arith.andi %65, %67 : vector<1x8x128xi1>
      %c0_26 = arith.constant 0 : index
      %c0_27 = arith.constant 0 : index
      %69 = vector.load %arg5[%c0_26, %c0_27] : memref<1x1xf32, #tpu.memory_space<vmem>>, vector<1x1xf32>
      %cst_28 = arith.constant 0.000000e+00 : f32
      %70 = vector.shape_cast %69 : vector<1x1xf32> to vector<1x1x1xf32>
      %71 = vector.broadcast %70 : vector<1x1x1xf32> to vector<1x8x128xf32>
      %72 = vector.broadcast %cst_28 : f32 to vector<1x8x128xf32>
      %73 = arith.select %68, %71, %72 : vector<1x8x128xi1>, vector<1x8x128xf32>
      %c0_29 = arith.constant 0 : index
      %c0_30 = arith.constant 0 : index
      %c0_31 = arith.constant 0 : index
      %74 = vector.load %arg4[%c0_29, %c0_30, %c0_31] : memref<1x8x128xf32, #tpu.memory_space<vmem>>, vector<1x8x128xf32>
      tpu.vector_store %arg4[%c0_29, %c0_30, %c0_31], %73 {strides = array<i32>} : memref<1x8x128xf32, #tpu.memory_space<vmem>>, vector<1x8x128xf32>,
    } else {
    }
    return
  }
  func.func @transform_0(%arg0: i32, %arg1: i32) -> (i32, i32) {
    %c1_i32 = arith.constant 1 : i32
    %0 = arith.muli %arg0, %c1_i32 : i32
    %1 = arith.addi %0, %arg1 : i32
    %c0_i32 = arith.constant 0 : i32
    %2 = arith.minsi %1, %c0_i32 : i32
    %c0_i32_0 = arith.constant 0 : i32
    %c0_i32_1 = arith.constant 0 : i32
    return %2, %c0_i32_0 : i32, i32
  }
  func.func @transform_1(%arg0: i32, %arg1: i32) -> (i32, i32) {
    %c1_i32 = arith.constant 1 : i32
    %0 = arith.muli %arg0, %c1_i32 : i32
    %1 = arith.addi %0, %arg1 : i32
    %c0_i32 = arith.constant 0 : i32
    %2 = arith.minsi %1, %c0_i32 : i32
    %c0_i32_0 = arith.constant 0 : i32
    %c0_i32_1 = arith.constant 0 : i32
    return %2, %c0_i32_0 : i32, i32
  }
  func.func @transform_2(%arg0: i32, %arg1: i32) -> (i32, i32, i32) {
    %c0_i32 = arith.constant 0 : i32
    %c0_i32_0 = arith.constant 0 : i32
    %c0_i32_1 = arith.constant 0 : i32
    return %arg0, %c0_i32, %c0_i32_0 : i32, i32, i32
  }
}

</mosaic_0001>

<llo_original>
// kernel: tpu_custom_call.1
$region0: #{tpu_custom_call.1}
  #allocation0 [shape = 'u32[]', space=smem, size = 0x4, offset = 0x4, fixed_abs, tag = 'smem constant byte address 0x4 - core index']
  #allocation1 [shape = 'u32[144,128]{1,0:T(1,128)}', space=vmem, size = 0x12000, scoped, tag = 'internal scratch']
  #allocation2 [shape = 'f32[1,1]{1,0:T(1,128)}', space=vmem, size = 0x200, scoped, tag = 'scratch operand']
  %s0 = inlined_call_operand.hbm [shape: f32[16,32], index: 0, kind: input, shape index: {}]
  %s1 = inlined_call_operand.hbm [shape: f32[16,32], index: 1, kind: input, shape index: {}]
  %s2 = inlined_call_operand.hbm [shape: f32[1,8,128], index: 2, kind: output, shape index: {}]
  %s3 = sld [smem:[#allocation0]]
  $region34: #{tpu_custom_call.1} parent=0
    _
  %s5 = ssub.s32 1, %s3
  %s6 = scalar_select 0, %s5, %s3
  $region1: #{tpu_custom_call.1} parent=0
    #allocation3 [shape = 'u8[8192]{0}', space=vmem, size = 0x2000, scoped, tag = 'input window, operand 0, single buffered']
    #allocation4 [shape = 's32[1]{0}', space=sflag, size = 0x4, scoped, tag = 'scoped memory for tpu_custom_call.1']
    #allocation5 [shape = 's32[1]{0}', space=sflag, size = 0x4, scoped, tag = 'scoped memory for tpu_custom_call.1']
    #allocation6 [shape = 'u8[8192]{0}', space=vmem, size = 0x2000, scoped, tag = 'input window, operand 1, single buffered']
    #allocation7 [shape = 's32[1]{0}', space=sflag, size = 0x4, scoped, tag = 'scoped memory for tpu_custom_call.1']
    #allocation8 [shape = 'u8[4096]{0}', space=vmem, size = 0x1000, scoped, tag = 'output window, operand 0, single buffered']
    %7 = vsyncpa [#allocation4], 0
    %8 = vsyncpa [#allocation7], 0
    %9 = vsyncpa [#allocation5], 0
    // Predicated region
    $region2: #{tpu_custom_call.1} parent=1 // pred_check
      _
    $region3: #{tpu_custom_call.1} parent=1 // pred_check_branch
      %11 = sbr.rel (0) target = $region5
    $region4: #{tpu_custom_call.1} parent=1 // pred_region
      %s12 = sadd.s32 0, 0
      %p13 = scmp.lt.s32.totalorder %s12, 0
      %s14 = scalar_select %p13, %s12, 0
      %s15 = smul.u32 2, %s14
      %s17 = ssub.s32 256, 256
      %18 = vsyncadd [#allocation4], %s17
      %s19 = smul.addr %s15, 128
      %s20 = scalar_lea.hbm %s0, %s19
      %s21 = sshll.u32 [#allocation3], 4
      %s22 = int_to_ptr.vmem [resolvable:$true] %s21
      %27 = dma.hbm_to_vmem [thread:$0]  %s20, 256, %s22, [#allocation4], 128, 128, 8
    $region5: #{tpu_custom_call.1} parent=1 // pred_fallthru
      _
    // Predicated region
    $region6: #{tpu_custom_call.1} parent=1 // pred_check
      _
    $region7: #{tpu_custom_call.1} parent=1 // pred_check_branch
      %29 = sbr.rel (0) target = $region9
    $region8: #{tpu_custom_call.1} parent=1 // pred_region
      %s30 = sadd.s32 0, 0
      %p31 = scmp.lt.s32.totalorder %s30, 0
      %s32 = scalar_select %p31, %s30, 0
      %s33 = smul.u32 2, %s32
      %s35 = ssub.s32 256, 256
      %36 = vsyncadd [#allocation7], %s35
      %s37 = smul.addr %s33, 128
      %s38 = scalar_lea.hbm %s1, %s37
      %s39 = sshll.u32 [#allocation6], 4
      %s40 = int_to_ptr.vmem [resolvable:$true] %s39
      %45 = dma.hbm_to_vmem [thread:$0]  %s38, 256, %s40, [#allocation7], 128, 128, 8
    $region9: #{tpu_custom_call.1} parent=1 // pred_fallthru
      _
    // Predicated region
    $region10: #{tpu_custom_call.1} parent=1 // pred_check
      _
    $region11: #{tpu_custom_call.1} parent=1 // pred_check_branch
      %47 = sbr.rel (0) target = $region13
    $region12: #{tpu_custom_call.1} parent=1 // pred_region
      %48 = dma.done [#allocation4], 256
    $region13: #{tpu_custom_call.1} parent=1 // pred_fallthru
      _
    // Predicated region
    $region14: #{tpu_custom_call.1} parent=1 // pred_check
      _
    $region15: #{tpu_custom_call.1} parent=1 // pred_check_branch
      %50 = sbr.rel (0) target = $region17
    $region16: #{tpu_custom_call.1} parent=1 // pred_region
      %51 = dma.done [#allocation7], 256
    $region17: #{tpu_custom_call.1} parent=1 // pred_fallthru
      _
    %s52 = sadd.s32 0, 0
    %p53 = scmp.lt.s32.totalorder %s52, 0
    %s54 = scalar_select %p53, %s52, 0
    %s55 = smul.u32 2, %s54
    %s56 = sadd.s32 0, 0
    %p57 = scmp.lt.s32.totalorder %s56, 0
    %s58 = scalar_select %p57, %s56, 0
    %s59 = smul.u32 2, %s58
    %p60 = scmp.eq.s32.totalorder 0, 0
    // Predicated region
    $region18: #{tpu_custom_call.1} parent=1 // pred_check
      %p61 = pneg %p60
    $region19: #{tpu_custom_call.1} parent=1 // pred_check_branch
      %63 = sbr.rel (%p61) target = $region21
    $region20: #{tpu_custom_call.1} parent=1 // pred_region
      %vm64 = vcmask 0
      %65 = vst.msk [vmem:[#allocation2] sm:$0x1] %vm64, 0.0
    $region21: #{tpu_custom_call.1} parent=1 // pred_fallthru
      _
    %v66 = vld [vmem:[#allocation3] sm:$0xff]
    %v67 = vld [vmem:[#allocation3 + $0x8] sm:$0xff]
    %v68 = vld [vmem:[#allocation6] sm:$0xff]
    %v69 = vld [vmem:[#allocation6 + $0x8] sm:$0xff]
    %vm70 = vcmp.gt.f32.partialorder %v68, 0.5
    %vm71 = vcmp.gt.f32.partialorder %v69, 0.5
    %v72 = vsub.f32 0.0, %v66
    %v73 = vsub.f32 0.0, %v67
    %v74 = vsel %vm70, %v72, -1e+12
    %v75 = vsel %vm71, %v73, -1e+12
    %vm76 = vcmask 261120
    %v77 = vsel %vm76, %v74, -inf
    %78 = vmax.xlane.f32.xlu0 %v77
    %v79 = vpop.xlane.xlu0 %78
    %v80 = vsel %vm76, %v75, -inf
    %81 = vmax.xlane.f32.xlu0 %v80
    %v82 = vpop.xlane.xlu0 %81
    %v83 = vmax.f32 %v79, 0.0
    %v84 = vmax.f32 %v82, 0.0
    %v85 = vsub.f32 %v74, %v83
    %v86 = vsub.f32 %v75, %v84
    %v87 = vmul.f32 %v85, 1.442695
    %v88 = vpow.pop %v87
    %v89 = vmul.f32 %v86, 1.442695
    %v90 = vpow.pop %v89
    %v91 = vsel %vm76, %v88, 0.0
    %92 = vadd.xlane.f32.xlu0 %v91
    %v93 = vpop.xlane.xlu0 %92
    %v94 = vsel %vm76, %v90, 0.0
    %95 = vadd.xlane.f32.xlu0 %v94
    %v96 = vpop.xlane.xlu0 %95
    %v97 = vsub.f32 0.0, %v83
    %v98 = vsub.f32 0.0, %v84
    %v99 = vmul.f32 %v97, 1.442695
    %v100 = vpow.pop %v99
    %v101 = vmul.f32 %v98, 1.442695
    %v102 = vpow.pop %v101
    %v103 = vadd.f32 %v93, %v100
    %v104 = vadd.f32 %v96, %v102
    %v105 = vlog2.pop %v103
    %v106 = vmul.f32 %v105, 0.6931472
    %v107 = vlog2.pop %v104
    %v108 = vmul.f32 %v107, 0.6931472
    %v109 = vadd.f32 %v106, %v83
    %v110 = vadd.f32 %v108, %v84
    %v111 = vsel %vm70, -1e+12, %v66
    %v112 = vsel %vm71, -1e+12, %v67
    %v113 = vsel %vm76, %v111, -inf
    %114 = vmax.xlane.f32.xlu0 %v113
    %v115 = vpop.xlane.xlu0 %114
    %v116 = vsel %vm76, %v112, -inf
    %117 = vmax.xlane.f32.xlu0 %v116
    %v118 = vpop.xlane.xlu0 %117
    %v119 = vmax.f32 %v115, 0.0
    %v120 = vmax.f32 %v118, 0.0
    %v121 = vsub.f32 %v111, %v119
    %v122 = vsub.f32 %v112, %v120
    %v123 = vmul.f32 %v121, 1.442695
    %v124 = vpow.pop %v123
    %v125 = vmul.f32 %v122, 1.442695
    %v126 = vpow.pop %v125
    %v127 = vsel %vm76, %v124, 0.0
    %128 = vadd.xlane.f32.xlu0 %v127
    %v129 = vpop.xlane.xlu0 %128
    %v130 = vsel %vm76, %v126, 0.0
    %131 = vadd.xlane.f32.xlu0 %v130
    %v132 = vpop.xlane.xlu0 %131
    %v133 = vsub.f32 0.0, %v119
    %v134 = vsub.f32 0.0, %v120
    %v135 = vmul.f32 %v133, 1.442695
    %v136 = vpow.pop %v135
    %v137 = vmul.f32 %v134, 1.442695
    %v138 = vpow.pop %v137
    %v139 = vadd.f32 %v129, %v136
    %v140 = vadd.f32 %v132, %v138
    %v141 = vlog2.pop %v139
    %v142 = vmul.f32 %v141, 0.6931472
    %v143 = vlog2.pop %v140
    %v144 = vmul.f32 %v143, 0.6931472
    %v145 = vadd.f32 %v142, %v119
    %v146 = vadd.f32 %v144, %v120
    %v147 = vadd.f32 %v109, %v145
    %v148 = vadd.f32 %v110, %v146
    %s149 = sadd.s32 0, 0
    %s150 = smul.u32 %s149, 16
    %v151 = vlaneseq
    %v152 = vshrl.u32 %v151, 7
    %v153 = vadd.s32 %v152, 8
    %v154 = vstv %s150
    %v155 = vadd.s32 %v154, %v152
    %v156 = vadd.s32 %v154, %v153
    %vm157 = vcmp.lt.s32.totalorder %v155, 16
    %vm158 = vcmp.lt.s32.totalorder %v156, 16
    %v159 = vld [vmem:[#allocation2] sm:$0x1]
    %v160 = vsel %vm157, %v147, 0.0
    %v161 = vsel %vm158, %v148, 0.0
    %v162 = vadd.f32 %v160, %v161
    %v163 = vrot.slane %v162, 4
    %v164 = vadd.f32 %v162, %v163
    %v165 = vrot.slane %v164, 2
    %v166 = vadd.f32 %v164, %v165
    %v167 = vrot.slane %v166, 1
    %v168 = vadd.f32 %v166, %v167
    %v169 = vadd.f32 %v159, %v168
    %vm170 = vcmask 0
    %171 = vst.msk [vmem:[#allocation2] sm:$0x1] %vm170, %v169
    // Predicated region
    $region22: #{tpu_custom_call.1} parent=1 // pred_check
      %p172 = pneg %p60
    $region23: #{tpu_custom_call.1} parent=1 // pred_check_branch
      %174 = sbr.rel (%p172) target = $region25
    $region24: #{tpu_custom_call.1} parent=1 // pred_region
      %v175 = vlaneseq
      %v176 = vand.u32 %v175, 127
      %vm177 = vcmp.eq.s32.totalorder %v152, 0
      %vm178 = vcmp.eq.s32.totalorder %v176, 0
      %vm179 = vmand %vm177, %vm178
      %v180 = vld [vmem:[#allocation2] sm:$0x1]
      %v182 = vlaneseq
      %v183 = vshrl.u32 %v182, 7
      %v184 = vsub.s32 0, %v183
      %v185 = vrot.slane %v180, %v184
      %186 = vset.pattern.permute.xlu0 0
      %187 = vperm.xlu0 %186, %v185
      %v188 = vpop.permute.xlu0 %187
      %v190 = vsel %vm179, %v188, 0.0
      %191 = vst [vmem:[#allocation8] sm:$0xff] %v190
    $region25: #{tpu_custom_call.1} parent=1 // pred_fallthru
      _
    // Predicated region
    $region26: #{tpu_custom_call.1} parent=1 // pred_check
      _
    $region27: #{tpu_custom_call.1} parent=1 // pred_check_branch
      %193 = sbr.rel (0) target = $region29
    $region28: #{tpu_custom_call.1} parent=1 // pred_region
      %s195 = ssub.s32 128, 128
      %196 = vsyncadd [#allocation5], %s195
      %s198 = sshll.u32 [#allocation8], 4
      %s199 = int_to_ptr.vmem [resolvable:$true] %s198
      %201 = dma.vmem_to_hbm [thread:$0]  %s199, 128, %s2, [#allocation5]
    $region29: #{tpu_custom_call.1} parent=1 // pred_fallthru
      _
    // Predicated region
    $region30: #{tpu_custom_call.1} parent=1 // pred_check
      _
    $region31: #{tpu_custom_call.1} parent=1 // pred_check_branch
      %203 = sbr.rel (0) target = $region33
    $region32: #{tpu_custom_call.1} parent=1 // pred_region
      %204 = dma.done [#allocation5], 128
    $region33: #{tpu_custom_call.1} parent=1 // pred_fallthru
      _
    %205 = vsyncpa [#allocation4], 1
    %206 = vsyncpa [#allocation7], 1
    %207 = vsyncpa [#allocation5], 1

</llo_original>
